<compile_context>
chip_gen: v6e
topology: v6e:2x2x1
jax: 0.10.0
libtpu: 0.0.40
codegen_flags: <defaults>
</compile_context>

<pallas_src>
import jax
import jax.numpy as jnp
from jax.experimental import pallas as pl
from jax.experimental.pallas import tpu as pltpu


_ACTS = {
    "relu": lambda v: jnp.maximum(v, 0.0),
    "tanh": jnp.tanh,
    "sigmoid": jax.nn.sigmoid,
    "identity": lambda v: v,
    "linear": lambda v: v,
}


def _round_up(n, m):
    return ((n + m - 1) // m) * m


def make_cnn_kernel(num_hidden, activations, num_filters, mxu_dtype):
    """Fused conv1d(k=1) + ReLU + MLP + out-linear kernel body (one batch tile)."""

    def kernel(*refs):
        # refs = (x, conv_scale_row, conv_bias_row,
        #         W1, b1, ..., W_h, b_h, Wout, bout, out)
        x_ref, cs_ref, cb_ref = refs[0], refs[1], refs[2]
        layer_refs = refs[3:3 + 2 * num_hidden]
        wo_ref, bo_ref = refs[3 + 2 * num_hidden], refs[4 + 2 * num_hidden]
        o_ref = refs[-1]

        x = x_ref[...]                                         # (TB, L) f32

        # --- Conv1d(k=1) + ReLU as a single lane-replicated fma --------------
        # flatten index f*L + l  ->  relu(conv_w[f] * x[:, l] + conv_b[f])
        if num_filters > 1:
            x_rep = jnp.concatenate([x] * num_filters, axis=-1)  # (TB, F*L)
        else:
            x_rep = x
        cf = jnp.maximum(x_rep * cs_ref[...] + cb_ref[...], 0.0)  # (TB, F*L) f32

        # --- First Linear: one (TB, F*L) x (F*L, N1p) MXU matmul -------------
        h = jnp.dot(cf.astype(mxu_dtype), layer_refs[0][...],
                    preferred_element_type=jnp.float32) + layer_refs[1][...]
        h = _ACTS[activations[0]](h)

        # --- Remaining hidden layers -----------------------------------------
        for i in range(1, num_hidden):
            h = jnp.dot(h.astype(mxu_dtype), layer_refs[2 * i][...],
                        preferred_element_type=jnp.float32) + layer_refs[2 * i + 1][...]
            h = _ACTS[activations[i]](h)

        # Dropout(p=0.6) is identity in inference mode.
        # TODO(synk): training-mode dropout (p=0.6) not implemented.
        # Output layer columns are unpadded (out_dim lanes) -> small writeback.
        o_ref[...] = (jnp.dot(h.astype(mxu_dtype), wo_ref[...],
                              preferred_element_type=jnp.float32) + bo_ref[...])

    return kernel


def cnn_torch_forward(x, params, activations, *, batch_tile=None,
                      mxu_dtype=jnp.bfloat16):
    """x: (B, L) f32. params: dict of weights (see init_params)."""
    x = x.astype(jnp.float32)
    B, L = x.shape
    F = params["conv_w"].shape[0]
    num_hidden = len(activations)
    out_dim = params["out_b"].shape[0]

    # --- generation-aware VMEM limit / default batch tile ---------------------
    try:
        vmem_cap = int(pltpu.get_tpu_info().vmem_capacity_bytes)
    except Exception:
        vmem_cap = 64 * 1024 * 1024          # conservative (v7x per-TC)
    vmem_limit = min(vmem_cap * 3 // 4, 100 * 1024 * 1024)
    if batch_tile is None:
        batch_tile = 1024 if vmem_cap >= 128 * 1024 * 1024 else 512

    # --- batch tiling: grid over the batch ------------------------------------
    # Ensure >= 2 grid steps whenever the batch allows so v7x's two TensorCores
    # both get work ("parallel" axis); on single-TC chips the extra step costs
    # only ~0.35 us of per-step overhead.
    b8 = _round_up(B, 8)
    tb = min(batch_tile, b8)
    if b8 >= 16:
        tb = min(tb, max(8, _round_up(b8 // 2, 8)))
    b_pad = _round_up(B, tb)
    if b_pad != B:
        x = jnp.pad(x, ((0, b_pad - B), (0, 0)))
    grid = (b_pad // tb,)

    # --- pad hidden widths to lane multiples (128) ----------------------------
    hidden = [params[f"w{i}"].shape[1] for i in range(num_hidden)]
    hidden_pad = [_round_up(n, 128) for n in hidden]

    # conv as (1, F*L) scale/bias rows over the flattened (f*L + l) axis.
    scale_row = jnp.repeat(params["conv_w"].astype(jnp.float32), L).reshape(1, F * L)
    bias_row = jnp.repeat(params["conv_b"].astype(jnp.float32), L).reshape(1, F * L)

    args = [x, scale_row, bias_row]
    in_specs = [
        pl.BlockSpec((tb, L), lambda i: (i, 0)),
        pl.BlockSpec((1, F * L), lambda i: (0, 0)),
        pl.BlockSpec((1, F * L), lambda i: (0, 0)),
    ]

    # Hidden layers. Invariant: padded weight ROWS are zero so junk values in
    # the previous layer's padded lanes (e.g. sigmoid(0)=0.5) are annihilated;
    # padded COLS + zero bias pad keep pre-activation padded lanes at 0.
    prev, prev_pad = F * L, F * L
    for li in range(num_hidden):
        w, b = params[f"w{li}"], params[f"b{li}"]
        n, npad = hidden[li], hidden_pad[li]
        wp = jnp.pad(w, ((0, prev_pad - prev), (0, npad - n))).astype(mxu_dtype)
        bp = jnp.pad(b, (0, npad - n)).reshape(1, npad).astype(jnp.float32)
        args += [wp, bp]
        in_specs += [pl.BlockSpec(wp.shape, lambda i: (0, 0)),
                     pl.BlockSpec(bp.shape, lambda i: (0, 0))]
        prev, prev_pad = n, npad

    # Output layer: rows padded (zero), columns UNPADDED -> (tb, out_dim)
    # writeback instead of (tb, 128).
    wop = jnp.pad(params["out_w"],
                  ((0, prev_pad - prev), (0, 0))).astype(mxu_dtype)
    bop = params["out_b"].reshape(1, out_dim).astype(jnp.float32)
    args += [wop, bop]
    in_specs += [pl.BlockSpec(wop.shape, lambda i: (0, 0)),
                 pl.BlockSpec(bop.shape, lambda i: (0, 0))]

    # --- advisory cost estimate ------------------------------------------------
    flops = 2 * b_pad * (F * L * hidden_pad[0]
                         + sum(hidden_pad[i - 1] * hidden_pad[i]
                               for i in range(1, num_hidden))
                         + hidden_pad[-1] * out_dim)
    transcendentals = b_pad * sum(hidden[i] for i in range(num_hidden)
                                  if activations[i] in ("tanh", "sigmoid"))
    param_bytes = sum(int(a.size) * a.dtype.itemsize for a in args[1:])
    bytes_accessed = int(x.size) * 4 + b_pad * out_dim * 4 + param_bytes

    kernel = make_cnn_kernel(num_hidden, activations, F, mxu_dtype)
    out = pl.pallas_call(
        kernel,
        out_shape=jax.ShapeDtypeStruct((b_pad, out_dim), jnp.float32),
        grid=grid,
        in_specs=in_specs,
        out_specs=pl.BlockSpec((tb, out_dim), lambda i: (i, 0)),
        compiler_params=pltpu.CompilerParams(
            dimension_semantics=("parallel",),
            vmem_limit_bytes=vmem_limit),
        cost_estimate=pl.CostEstimate(
            flops=int(flops),
            transcendentals=int(transcendentals),
            bytes_accessed=int(bytes_accessed)),
    )(*args)

    return out[:B, :]


def init_params(key, input_shape, output_shape, filters, in_nn):
    """Deterministic synthetic parameters matching CNNTorch.__init__ shapes."""
    keys = jax.random.split(key, 4 + 2 * len(in_nn))
    params = {}
    # Conv1d(1, filters, kernel_size=1): weight (filters, 1, 1), bias (filters,)
    params["conv_w"] = jax.random.normal(keys[0], (filters,), jnp.float32) * 0.1
    params["conv_b"] = jax.random.normal(keys[1], (filters,), jnp.float32) * 0.1
    in_features = filters * input_shape
    for i, out_features in enumerate(in_nn):
        params[f"w{i}"] = (
            jax.random.normal(keys[2 + 2 * i], (in_features, out_features),
                              jnp.float32) * 0.1)
        params[f"b{i}"] = (
            jax.random.normal(keys[3 + 2 * i], (out_features,), jnp.float32) * 0.1)
        in_features = out_features
    params["out_w"] = (
        jax.random.normal(keys[-2], (in_nn[-1], output_shape), jnp.float32) * 0.1)
    params["out_b"] = jax.random.normal(keys[-1], (output_shape,), jnp.float32) * 0.1
    return params


def ref_forward(x, params, activations, mxu_dtype=jnp.bfloat16):
    """Plain-JAX reference with the same bf16-operand / f32-accumulate math."""
    B = x.shape[0]
    conv = jnp.maximum(
        x[:, None, :] * params["conv_w"][None, :, None]
        + params["conv_b"][None, :, None], 0.0)               # (B, F, L)
    h = conv.reshape(B, -1)
    for i, act in enumerate(activations):
        h = jnp.dot(h.astype(mxu_dtype), params[f"w{i}"].astype(mxu_dtype),
                    preferred_element_type=jnp.float32) + params[f"b{i}"]
        h = _ACTS[act](h)
    return jnp.dot(h.astype(mxu_dtype), params["out_w"].astype(mxu_dtype),
                   preferred_element_type=jnp.float32) + params["out_b"]


if __name__ == "__main__":
    # Small config consistent with the module's forward.
    B = 2
    input_shape = 16       # L (sequence length seen by Conv1d)
    output_shape = 8
    filters = 4
    in_nn = [32, 32]
    activations = ["relu", "tanh"]

    key = jax.random.PRNGKey(0)
    k_x, k_p = jax.random.split(key)
    x = jax.random.normal(k_x, (B, input_shape), jnp.float32)
    params = init_params(k_p, input_shape, output_shape, filters, in_nn)

    out = cnn_torch_forward(x, params, activations)
    out = jax.block_until_ready(out)

    ref = ref_forward(x, params, activations)
    assert out.shape == (B, output_shape)
    assert jnp.allclose(out, ref, atol=5e-3, rtol=5e-3), "mismatch vs reference"
    print("KERNEL_OK")
</pallas_src>

<mosaic_0001>
module attributes {stable_mosaic.version = 11 : i64} {
  func.func @kernel(%arg0: i32, %arg1: memref<8x16xf32, #tpu.memory_space<vmem>>, %arg2: memref<1x64xf32, #tpu.memory_space<vmem>>, %arg3: memref<1x64xf32, #tpu.memory_space<vmem>>, %arg4: memref<64x128xbf16, #tpu.memory_space<vmem>>, %arg5: memref<1x128xf32, #tpu.memory_space<vmem>>, %arg6: memref<128x128xbf16, #tpu.memory_space<vmem>>, %arg7: memref<1x128xf32, #tpu.memory_space<vmem>>, %arg8: memref<128x8xbf16, #tpu.memory_space<vmem>>, %arg9: memref<1x8xf32, #tpu.memory_space<vmem>>, %arg10: memref<8x8xf32, #tpu.memory_space<vmem>>) attributes {dimension_semantics = [#tpu.dimension_semantics<parallel>], iteration_bounds = array<i64: 1>, scalar_prefetch = 0 : i64, scratch_operands = 0 : i64, tpu.core_type = #tpu.core_type<tc>, window_params = [{transform_indices = @transform_0, window_bounds = array<i64: 8, 16>}, {pipeline_mode = #tpu.pipeline_mode<synchronous>, transform_indices = @transform_1, window_bounds = array<i64: 1, 64>}, {pipeline_mode = #tpu.pipeline_mode<synchronous>, transform_indices = @transform_2, window_bounds = array<i64: 1, 64>}, {pipeline_mode = #tpu.pipeline_mode<synchronous>, transform_indices = @transform_3, window_bounds = array<i64: 64, 128>}, {pipeline_mode = #tpu.pipeline_mode<synchronous>, transform_indices = @transform_4, window_bounds = array<i64: 1, 128>}, {pipeline_mode = #tpu.pipeline_mode<synchronous>, transform_indices = @transform_5, window_bounds = array<i64: 128, 128>}, {pipeline_mode = #tpu.pipeline_mode<synchronous>, transform_indices = @transform_6, window_bounds = array<i64: 1, 128>}, {pipeline_mode = #tpu.pipeline_mode<synchronous>, transform_indices = @transform_7, window_bounds = array<i64: 128, 8>}, {pipeline_mode = #tpu.pipeline_mode<synchronous>, transform_indices = @transform_8, window_bounds = array<i64: 1, 8>}, {transform_indices = @transform_9, window_bounds = array<i64: 8, 8>}]} {
    %c0 = arith.constant 0 : index
    %c0_0 = arith.constant 0 : index
    %0 = vector.load %arg1[%c0, %c0_0] : memref<8x16xf32, #tpu.memory_space<vmem>>, vector<8x16xf32>
    %1 = tpu.concatenate %0, %0, %0, %0 in 1 : vector<8x16xf32>, vector<8x16xf32>, vector<8x16xf32>, vector<8x16xf32> -> vector<8x64xf32>
    %c0_1 = arith.constant 0 : index
    %c0_2 = arith.constant 0 : index
    %2 = vector.load %arg2[%c0_1, %c0_2] : memref<1x64xf32, #tpu.memory_space<vmem>>, vector<1x64xf32>
    %3 = vector.broadcast %2 : vector<1x64xf32> to vector<8x64xf32>
    %4 = arith.mulf %1, %3 : vector<8x64xf32>
    %c0_3 = arith.constant 0 : index
    %c0_4 = arith.constant 0 : index
    %5 = vector.load %arg3[%c0_3, %c0_4] : memref<1x64xf32, #tpu.memory_space<vmem>>, vector<1x64xf32>
    %6 = vector.broadcast %5 : vector<1x64xf32> to vector<8x64xf32>
    %7 = arith.addf %4, %6 : vector<8x64xf32>
    %cst = arith.constant 0.000000e+00 : f32
    %8 = vector.broadcast %cst : f32 to vector<8x64xf32>
    %9 = arith.maximumf %7, %8 : vector<8x64xf32>
    %10 = arith.truncf %9 : vector<8x64xf32> to vector<8x64xbf16>
    %c0_5 = arith.constant 0 : index
    %c0_6 = arith.constant 0 : index
    %11 = vector.load %arg4[%c0_5, %c0_6] : memref<64x128xbf16, #tpu.memory_space<vmem>>, vector<64x128xbf16>
    %cst_7 = arith.constant dense<0.000000e+00> : vector<8x128xf32>
    %12 = tpu.matmul %10, %11, %cst_7 {dimension_numbers = #tpu.dot_dimension_numbers<[1], [0], [0], [1], [0, 0, 1, 1], [], []>} : vector<8x64xbf16>, vector<64x128xbf16>, vector<8x128xf32> -> vector<8x128xf32>
    %c0_8 = arith.constant 0 : index
    %c0_9 = arith.constant 0 : index
    %13 = vector.load %arg5[%c0_8, %c0_9] : memref<1x128xf32, #tpu.memory_space<vmem>>, vector<1x128xf32>
    %14 = vector.broadcast %13 : vector<1x128xf32> to vector<8x128xf32>
    %15 = arith.addf %12, %14 : vector<8x128xf32>
    %cst_10 = arith.constant 0.000000e+00 : f32
    %16 = vector.broadcast %cst_10 : f32 to vector<8x128xf32>
    %17 = arith.maximumf %15, %16 : vector<8x128xf32>
    %18 = arith.truncf %17 : vector<8x128xf32> to vector<8x128xbf16>
    %c0_11 = arith.constant 0 : index
    %c0_12 = arith.constant 0 : index
    %19 = vector.load %arg6[%c0_11, %c0_12] : memref<128x128xbf16, #tpu.memory_space<vmem>>, vector<128x128xbf16>
    %cst_13 = arith.constant dense<0.000000e+00> : vector<8x128xf32>
    %20 = tpu.matmul %18, %19, %cst_13 {dimension_numbers = #tpu.dot_dimension_numbers<[1], [0], [0], [1], [0, 0, 1, 1], [], []>} : vector<8x128xbf16>, vector<128x128xbf16>, vector<8x128xf32> -> vector<8x128xf32>
    %c0_14 = arith.constant 0 : index
    %c0_15 = arith.constant 0 : index
    %21 = vector.load %arg7[%c0_14, %c0_15] : memref<1x128xf32, #tpu.memory_space<vmem>>, vector<1x128xf32>
    %22 = vector.broadcast %21 : vector<1x128xf32> to vector<8x128xf32>
    %23 = arith.addf %20, %22 : vector<8x128xf32>
    %24 = math.tanh %23 : vector<8x128xf32>
    %25 = arith.truncf %24 : vector<8x128xf32> to vector<8x128xbf16>
    %c0_16 = arith.constant 0 : index
    %c0_17 = arith.constant 0 : index
    %26 = vector.load %arg8[%c0_16, %c0_17] : memref<128x8xbf16, #tpu.memory_space<vmem>>, vector<128x8xbf16>
    %cst_18 = arith.constant dense<0.000000e+00> : vector<8x8xf32>
    %27 = tpu.matmul %25, %26, %cst_18 {dimension_numbers = #tpu.dot_dimension_numbers<[1], [0], [0], [1], [0, 0, 1, 1], [], []>} : vector<8x128xbf16>, vector<128x8xbf16>, vector<8x8xf32> -> vector<8x8xf32>
    %c0_19 = arith.constant 0 : index
    %c0_20 = arith.constant 0 : index
    %28 = vector.load %arg9[%c0_19, %c0_20] : memref<1x8xf32, #tpu.memory_space<vmem>>, vector<1x8xf32>
    %29 = vector.broadcast %28 : vector<1x8xf32> to vector<8x8xf32>
    %30 = arith.addf %27, %29 : vector<8x8xf32>
    %c0_21 = arith.constant 0 : index
    %c0_22 = arith.constant 0 : index
    %31 = vector.load %arg10[%c0_21, %c0_22] : memref<8x8xf32, #tpu.memory_space<vmem>>, vector<8x8xf32>
    tpu.vector_store %arg10[%c0_21, %c0_22], %30 {strides = array<i32>} : memref<8x8xf32, #tpu.memory_space<vmem>>, vector<8x8xf32>,
    return
  }
  func.func @transform_0(%arg0: i32) -> (i32, i32) {
    %c0_i32 = arith.constant 0 : i32
    %c0_i32_0 = arith.constant 0 : i32
    return %arg0, %c0_i32 : i32, i32
  }
  func.func @transform_1(%arg0: i32) -> (i32, i32) {
    %c0_i32 = arith.constant 0 : i32
    %c0_i32_0 = arith.constant 0 : i32
    %c0_i32_1 = arith.constant 0 : i32
    return %c0_i32, %c0_i32_0 : i32, i32
  }
  func.func @transform_2(%arg0: i32) -> (i32, i32) {
    %c0_i32 = arith.constant 0 : i32
    %c0_i32_0 = arith.constant 0 : i32
    %c0_i32_1 = arith.constant 0 : i32
    return %c0_i32, %c0_i32_0 : i32, i32
  }
  func.func @transform_3(%arg0: i32) -> (i32, i32) {
    %c0_i32 = arith.constant 0 : i32
    %c0_i32_0 = arith.constant 0 : i32
    %c0_i32_1 = arith.constant 0 : i32
    return %c0_i32, %c0_i32_0 : i32, i32
  }
  func.func @transform_4(%arg0: i32) -> (i32, i32) {
    %c0_i32 = arith.constant 0 : i32
    %c0_i32_0 = arith.constant 0 : i32
    %c0_i32_1 = arith.constant 0 : i32
    return %c0_i32, %c0_i32_0 : i32, i32
  }
  func.func @transform_5(%arg0: i32) -> (i32, i32) {
    %c0_i32 = arith.constant 0 : i32
    %c0_i32_0 = arith.constant 0 : i32
    %c0_i32_1 = arith.constant 0 : i32
    return %c0_i32, %c0_i32_0 : i32, i32
  }
  func.func @transform_6(%arg0: i32) -> (i32, i32) {
    %c0_i32 = arith.constant 0 : i32
    %c0_i32_0 = arith.constant 0 : i32
    %c0_i32_1 = arith.constant 0 : i32
    return %c0_i32, %c0_i32_0 : i32, i32
  }
  func.func @transform_7(%arg0: i32) -> (i32, i32) {
    %c0_i32 = arith.constant 0 : i32
    %c0_i32_0 = arith.constant 0 : i32
    %c0_i32_1 = arith.constant 0 : i32
    return %c0_i32, %c0_i32_0 : i32, i32
  }
  func.func @transform_8(%arg0: i32) -> (i32, i32) {
    %c0_i32 = arith.constant 0 : i32
    %c0_i32_0 = arith.constant 0 : i32
    %c0_i32_1 = arith.constant 0 : i32
    return %c0_i32, %c0_i32_0 : i32, i32
  }
  func.func @transform_9(%arg0: i32) -> (i32, i32) {
    %c0_i32 = arith.constant 0 : i32
    %c0_i32_0 = arith.constant 0 : i32
    return %arg0, %c0_i32 : i32, i32
  }
}

</mosaic_0001>

<llo_original>
// kernel: tpu_custom_call.1
$region0: #{tpu_custom_call.1}
  #allocation0 [shape = 'u32[]', space=smem, size = 0x4, offset = 0x4, fixed_abs, tag = 'smem constant byte address 0x4 - core index']
  #allocation1 [shape = 'u32[144,128]{1,0:T(1,128)}', space=vmem, size = 0x12000, scoped, tag = 'internal scratch']
  %s0 = inlined_call_operand.vmem [shape: f32[8,16], index: 0, kind: input, shape index: {}]
  %s1 = inlined_call_operand.vmem [shape: f32[1,64], index: 1, kind: input, shape index: {}]
  %s2 = inlined_call_operand.vmem [shape: f32[1,64], index: 2, kind: input, shape index: {}]
  %s3 = inlined_call_operand.hbm [shape: bf16[64,128], index: 3, kind: input, shape index: {}]
  %s4 = inlined_call_operand.hbm [shape: f32[1,128], index: 4, kind: input, shape index: {}]
  %s5 = inlined_call_operand.vmem [shape: bf16[128,128], index: 5, kind: input, shape index: {}]
  %s6 = inlined_call_operand.hbm [shape: f32[1,128], index: 6, kind: input, shape index: {}]
  %s7 = inlined_call_operand.vmem [shape: bf16[128,8], index: 7, kind: input, shape index: {}]
  %s8 = inlined_call_operand.vmem [shape: f32[1,8], index: 8, kind: input, shape index: {}]
  %s9 = inlined_call_operand.hbm [shape: f32[8,8], index: 9, kind: output, shape index: {}]
  %s10 = sld [smem:[#allocation0]]
  $region58: #{tpu_custom_call.1} parent=0
    _
  %s12 = ssub.s32 1, %s10
  %s13 = scalar_select 0, %s12, %s10
  $region1: #{tpu_custom_call.1} parent=0
    #allocation2 [shape = 'u8[16384]{0}', space=vmem, size = 0x4000, scoped, tag = 'input window, operand 3, single buffered']
    #allocation3 [shape = 's32[1]{0}', space=sflag, size = 0x4, scoped, tag = 'scoped memory for tpu_custom_call.1']
    #allocation4 [shape = 's32[1]{0}', space=sflag, size = 0x4, scoped, tag = 'scoped memory for tpu_custom_call.1']
    #allocation5 [shape = 'u8[512]{0}', space=vmem, size = 0x400, scoped, tag = 'input window, operand 4, single buffered']
    #allocation6 [shape = 's32[1]{0}', space=sflag, size = 0x4, scoped, tag = 'scoped memory for tpu_custom_call.1']
    #allocation7 [shape = 'u8[512]{0}', space=vmem, size = 0x400, scoped, tag = 'input window, operand 6, single buffered']
    #allocation8 [shape = 'u8[4096]{0}', space=vmem, size = 0x1000, scoped, tag = 'output window, operand 0, single buffered']
    %14 = vsyncpa [#allocation3], 0
    %15 = vsyncpa [#allocation6], 0
    %16 = vsyncpa [#allocation4], 0
    // Predicated region
    $region2: #{tpu_custom_call.1} parent=1 // pred_check
      _
    $region3: #{tpu_custom_call.1} parent=1 // pred_check_branch
      %18 = sbr.rel (0) target = $region5
    $region4: #{tpu_custom_call.1} parent=1 // pred_region
      _
    $region5: #{tpu_custom_call.1} parent=1 // pred_fallthru
      _
    // Predicated region
    $region6: #{tpu_custom_call.1} parent=1 // pred_check
      _
    $region7: #{tpu_custom_call.1} parent=1 // pred_check_branch
      %20 = sbr.rel (0) target = $region9
    $region8: #{tpu_custom_call.1} parent=1 // pred_region
      _
    $region9: #{tpu_custom_call.1} parent=1 // pred_fallthru
      _
    // Predicated region
    $region10: #{tpu_custom_call.1} parent=1 // pred_check
      _
    $region11: #{tpu_custom_call.1} parent=1 // pred_check_branch
      %22 = sbr.rel (0) target = $region13
    $region12: #{tpu_custom_call.1} parent=1 // pred_region
      _
    $region13: #{tpu_custom_call.1} parent=1 // pred_fallthru
      _
    // Predicated region
    $region14: #{tpu_custom_call.1} parent=1 // pred_check
      _
    $region15: #{tpu_custom_call.1} parent=1 // pred_check_branch
      %24 = sbr.rel (0) target = $region17
    $region16: #{tpu_custom_call.1} parent=1 // pred_region
      %s26 = ssub.s32 512, 512
      %27 = vsyncadd [#allocation3], %s26
      %s28 = sshll.u32 [#allocation2], 4
      %s29 = int_to_ptr.vmem [resolvable:$true] %s28
      %34 = dma.hbm_to_vmem [thread:$0]  %s3, 512, %s29, [#allocation3], 64, 64, 4
    $region17: #{tpu_custom_call.1} parent=1 // pred_fallthru
      _
    // Predicated region
    $region18: #{tpu_custom_call.1} parent=1 // pred_check
      _
    $region19: #{tpu_custom_call.1} parent=1 // pred_check_branch
      %36 = sbr.rel (0) target = $region21
    $region20: #{tpu_custom_call.1} parent=1 // pred_region
      %s38 = ssub.s32 16, 16
      %39 = vsyncadd [#allocation6], %s38
      %s41 = sshll.u32 [#allocation5], 4
      %s42 = int_to_ptr.vmem [resolvable:$true] %s41
      %44 = dma.hbm_to_vmem [thread:$0]  %s4, 16, %s42, [#allocation6]
    $region21: #{tpu_custom_call.1} parent=1 // pred_fallthru
      _
    // Predicated region
    $region22: #{tpu_custom_call.1} parent=1 // pred_check
      _
    $region23: #{tpu_custom_call.1} parent=1 // pred_check_branch
      %46 = sbr.rel (0) target = $region25
    $region24: #{tpu_custom_call.1} parent=1 // pred_region
      _
    $region25: #{tpu_custom_call.1} parent=1 // pred_fallthru
      _
    // Predicated region
    $region26: #{tpu_custom_call.1} parent=1 // pred_check
      _
    $region27: #{tpu_custom_call.1} parent=1 // pred_check_branch
      %48 = sbr.rel (0) target = $region29
    $region28: #{tpu_custom_call.1} parent=1 // pred_region
      %s50 = ssub.s32 16, 16
      %51 = vsyncadd [#allocation6], %s50
      %s53 = sshll.u32 [#allocation7], 4
      %s54 = int_to_ptr.vmem [resolvable:$true] %s53
      %56 = dma.hbm_to_vmem [thread:$0]  %s6, 16, %s54, [#allocation6]
    $region29: #{tpu_custom_call.1} parent=1 // pred_fallthru
      _
    // Predicated region
    $region30: #{tpu_custom_call.1} parent=1 // pred_check
      _
    $region31: #{tpu_custom_call.1} parent=1 // pred_check_branch
      %58 = sbr.rel (0) target = $region33
    $region32: #{tpu_custom_call.1} parent=1 // pred_region
      _
    $region33: #{tpu_custom_call.1} parent=1 // pred_fallthru
      _
    // Predicated region
    $region34: #{tpu_custom_call.1} parent=1 // pred_check
      _
    $region35: #{tpu_custom_call.1} parent=1 // pred_check_branch
      %60 = sbr.rel (0) target = $region37
    $region36: #{tpu_custom_call.1} parent=1 // pred_region
      _
    $region37: #{tpu_custom_call.1} parent=1 // pred_fallthru
      _
    // Predicated region
    $region38: #{tpu_custom_call.1} parent=1 // pred_check
      _
    $region39: #{tpu_custom_call.1} parent=1 // pred_check_branch
      %62 = sbr.rel (0) target = $region41
    $region40: #{tpu_custom_call.1} parent=1 // pred_region
      %63 = dma.done [#allocation3], 512
    $region41: #{tpu_custom_call.1} parent=1 // pred_fallthru
      _
    // Predicated region
    $region42: #{tpu_custom_call.1} parent=1 // pred_check
      _
    $region43: #{tpu_custom_call.1} parent=1 // pred_check_branch
      %65 = sbr.rel (0) target = $region45
    $region44: #{tpu_custom_call.1} parent=1 // pred_region
      %66 = dma.done [#allocation6], 16
    $region45: #{tpu_custom_call.1} parent=1 // pred_fallthru
      _
    // Predicated region
    $region46: #{tpu_custom_call.1} parent=1 // pred_check
      _
    $region47: #{tpu_custom_call.1} parent=1 // pred_check_branch
      %68 = sbr.rel (0) target = $region49
    $region48: #{tpu_custom_call.1} parent=1 // pred_region
      %69 = dma.done [#allocation6], 16
    $region49: #{tpu_custom_call.1} parent=1 // pred_fallthru
      _
    %v71 = vld [vmem:[%s0] sm:$0xff]
    %73 = vrot.lane.b32.xlu0 %v71, 16
    %v74 = vpop.permute.xlu0 %73
    %76 = vrot.lane.b32.xlu0 %v71, 32
    %v77 = vpop.permute.xlu0 %76
    %79 = vrot.lane.b32.xlu0 %v71, 48
    %v80 = vpop.permute.xlu0 %79
    %vm82 = vcmask 130048
    %v83 = vsel %vm82, %v71, %v74
    %vm84 = vcmask 261120
    %v85 = vsel %vm84, %v83, %v77
    %vm86 = vcmask 392192
    %v87 = vsel %vm86, %v85, %v80
    %v88 = vld [vmem:[%s1] sm:$0x1]
    %v90 = vlaneseq
    %v91 = vshrl.u32 %v90, 7
    %v92 = vsub.s32 0, %v91
    %v93 = vrot.slane %v88, %v92
    %v95 = vmul.f32 %v87, %v93
    %v96 = vld [vmem:[%s2] sm:$0x1]
    %v98 = vlaneseq
    %v99 = vshrl.u32 %v98, 7
    %v100 = vsub.s32 0, %v99
    %v101 = vrot.slane %v96, %v100
    %v103 = vadd.f32 %v95, %v101
    %v104 = vmax.f32 %v103, 0.0
    %v105 = vpack.c.bf16 %v104, %v104
    %v106 = vld [vmem:[#allocation2] sm:$0xf]
    %v107 = vld [vmem:[#allocation2 + $0x4] sm:$0xf]
    %v108 = vld [vmem:[#allocation2 + $0x8] sm:$0xf]
    %v109 = vld [vmem:[#allocation2 + $0xc] sm:$0xf]
    %v110 = vld [vmem:[#allocation2 + $0x10] sm:$0xf]
    %v111 = vld [vmem:[#allocation2 + $0x14] sm:$0xf]
    %v112 = vld [vmem:[#allocation2 + $0x18] sm:$0xf]
    %v113 = vld [vmem:[#allocation2 + $0x1c] sm:$0xf]
    %v114 = vld [vmem:[#allocation5] sm:$0x1]
    %v116 = vlaneseq
    %v117 = vshrl.u32 %v116, 7
    %v118 = vsub.s32 0, %v117
    %v119 = vrot.slane %v114, %v118
    %v129 = vunpack.c.l.b16 %v106
    %v130 = vunpack.c.l.b16 %v107
    %v131 = vunpack.c.l.b16 %v108
    %v132 = vunpack.c.l.b16 %v109
    %v133 = vunpack.c.l.b16 %v110
    %v134 = vunpack.c.l.b16 %v111
    %v135 = vunpack.c.l.b16 %v112
    %v136 = vunpack.c.l.b16 %v113
    %v137 = vpack.c.b16 %v130, %v129
    %v138 = vpack.c.b16 %v132, %v131
    %v139 = vpack.c.b16 %v134, %v133
    %v140 = vpack.c.b16 %v136, %v135
    %vm145 = vcmask 523264
    %v147 = vsel %vm145, %v105, 0
    %149 = vmatprep.subr.bf16.mxu0 0
    %150 = vmatpush1.bf16.msra.mxu0 0
    %151 = vmatprep.subr.bf16.mxu0 0
    %152 = vmatpush1.bf16.msra.mxu0 0
    %153 = vmatprep.subr.bf16.mxu0 0
    %154 = vmatpush1.bf16.msra.mxu0 0
    %155 = vmatprep.subr.bf16.mxu0 0
    %156 = vmatpush1.bf16.msra.mxu0 0
    %157 = vmatprep.subr.bf16.mxu0 0
    %158 = vmatpush1.bf16.msra.mxu0 %v140
    %159 = vmatprep.subr.bf16.mxu0 0
    %160 = vmatpush1.bf16.msra.mxu0 %v139
    %161 = vmatprep.subr.bf16.mxu0 0
    %162 = vmatpush1.bf16.msra.mxu0 %v138
    %163 = vmatprep.subr.bf16.mxu0 0
    %164 = vmatpush1.bf16.msra.mxu0 %v137
    %165 = vmatprep.subr.bf16.mxu0 0
    %166 = vmatpush2.bf16.msra.mxu0 0
    %167 = vmatprep.subr.bf16.mxu0 0
    %168 = vmatpush2.bf16.msra.mxu0 0
    %169 = vmatprep.subr.bf16.mxu0 0
    %170 = vmatpush2.bf16.msra.mxu0 0
    %171 = vmatprep.subr.bf16.mxu0 0
    %172 = vmatpush2.bf16.msra.mxu0 0
    %173 = vmatprep.subr.bf16.mxu0 0
    %174 = vmatpush2.bf16.msra.mxu0 0
    %175 = vmatprep.subr.bf16.mxu0 0
    %176 = vmatpush2.bf16.msra.mxu0 0
    %177 = vmatprep.subr.bf16.mxu0 0
    %178 = vmatpush2.bf16.msra.mxu0 0
    %179 = vmatprep.subr.bf16.mxu0 0
    %180 = vmatpush2.bf16.msra.mxu0 0
    %181 = vmatprep.mubr.bf16.mxu0 0
    %182 = vmatmul.mubr.bf16.gmra.mxu0 %v147
    %v183 = vpop.f32.mrf.mxu0
    %v184 = vadd.f32 %v119, %v183
    %v185 = vpop.f32.mrf.mxu0
    %v186 = vpop.f32.mrf.mxu0
    %v187 = vpop.f32.mrf.mxu0
    %188 = vdwg.mxu0
    %v189 = vmax.f32 %v184, 0.0
    %v190 = vpack.c.bf16 %v189, %v189
    %v191 = vld [vmem:[%s5] sm:$0xf]
    %v192 = vld [vmem:[%s5 + $0x4] sm:$0xf]
    %v193 = vld [vmem:[%s5 + $0x8] sm:$0xf]
    %v194 = vld [vmem:[%s5 + $0xc] sm:$0xf]
    %v195 = vld [vmem:[%s5 + $0x10] sm:$0xf]
    %v196 = vld [vmem:[%s5 + $0x14] sm:$0xf]
    %v197 = vld [vmem:[%s5 + $0x18] sm:$0xf]
    %v198 = vld [vmem:[%s5 + $0x1c] sm:$0xf]
    %v199 = vld [vmem:[%s5 + $0x20] sm:$0xf]
    %v200 = vld [vmem:[%s5 + $0x24] sm:$0xf]
    %v201 = vld [vmem:[%s5 + $0x28] sm:$0xf]
    %v202 = vld [vmem:[%s5 + $0x2c] sm:$0xf]
    %v203 = vld [vmem:[%s5 + $0x30] sm:$0xf]
    %v204 = vld [vmem:[%s5 + $0x34] sm:$0xf]
    %v205 = vld [vmem:[%s5 + $0x38] sm:$0xf]
    %v206 = vld [vmem:[%s5 + $0x3c] sm:$0xf]
    %v207 = vld [vmem:[#allocation7] sm:$0x1]
    %v209 = vlaneseq
    %v210 = vshrl.u32 %v209, 7
    %v211 = vsub.s32 0, %v210
    %v212 = vrot.slane %v207, %v211
    %v230 = vunpack.c.l.b16 %v191
    %v231 = vunpack.c.l.b16 %v192
    %v232 = vunpack.c.l.b16 %v193
    %v233 = vunpack.c.l.b16 %v194
    %v234 = vunpack.c.l.b16 %v195
    %v235 = vunpack.c.l.b16 %v196
    %v236 = vunpack.c.l.b16 %v197
    %v237 = vunpack.c.l.b16 %v198
    %v238 = vunpack.c.l.b16 %v199
    %v239 = vunpack.c.l.b16 %v200
    %v240 = vunpack.c.l.b16 %v201
    %v241 = vunpack.c.l.b16 %v202
    %v242 = vunpack.c.l.b16 %v203
    %v243 = vunpack.c.l.b16 %v204
    %v244 = vunpack.c.l.b16 %v205
    %v245 = vunpack.c.l.b16 %v206
    %v246 = vpack.c.b16 %v231, %v230
    %v247 = vpack.c.b16 %v233, %v232
    %v248 = vpack.c.b16 %v235, %v234
    %v249 = vpack.c.b16 %v237, %v236
    %v250 = vpack.c.b16 %v239, %v238
    %v251 = vpack.c.b16 %v241, %v240
    %v252 = vpack.c.b16 %v243, %v242
    %v253 = vpack.c.b16 %v245, %v244
    %262 = vmatprep.subr.bf16.mxu0 0
    %263 = vmatpush1.bf16.msra.mxu0 %v253
    %264 = vmatprep.subr.bf16.mxu0 0
    %265 = vmatpush1.bf16.msra.mxu0 %v252
    %266 = vmatprep.subr.bf16.mxu0 0
    %267 = vmatpush1.bf16.msra.mxu0 %v251
    %268 = vmatprep.subr.bf16.mxu0 0
    %269 = vmatpush1.bf16.msra.mxu0 %v250
    %270 = vmatprep.subr.bf16.mxu0 0
    %271 = vmatpush1.bf16.msra.mxu0 %v249
    %272 = vmatprep.subr.bf16.mxu0 0
    %273 = vmatpush1.bf16.msra.mxu0 %v248
    %274 = vmatprep.subr.bf16.mxu0 0
    %275 = vmatpush1.bf16.msra.mxu0 %v247
    %276 = vmatprep.subr.bf16.mxu0 0
    %277 = vmatpush1.bf16.msra.mxu0 %v246
    %278 = vmatprep.subr.bf16.mxu0 0
    %279 = vmatpush2.bf16.msra.mxu0 0
    %280 = vmatprep.subr.bf16.mxu0 0
    %281 = vmatpush2.bf16.msra.mxu0 0
    %282 = vmatprep.subr.bf16.mxu0 0
    %283 = vmatpush2.bf16.msra.mxu0 0
    %284 = vmatprep.subr.bf16.mxu0 0
    %285 = vmatpush2.bf16.msra.mxu0 0
    %286 = vmatprep.subr.bf16.mxu0 0
    %287 = vmatpush2.bf16.msra.mxu0 0
    %288 = vmatprep.subr.bf16.mxu0 0
    %289 = vmatpush2.bf16.msra.mxu0 0
    %290 = vmatprep.subr.bf16.mxu0 0
    %291 = vmatpush2.bf16.msra.mxu0 0
    %292 = vmatprep.subr.bf16.mxu0 0
    %293 = vmatpush2.bf16.msra.mxu0 0
    %294 = vmatprep.mubr.bf16.mxu0 0
    %295 = vmatmul.mubr.bf16.gmra.mxu0 %v190
    %v296 = vpop.f32.mrf.mxu0
    %v297 = vadd.f32 %v212, %v296
    %v298 = vpop.f32.mrf.mxu0
    %v299 = vpop.f32.mrf.mxu0
    %v300 = vpop.f32.mrf.mxu0
    %301 = vdwg.mxu0
    %v302 = vtanh.pop %v297
    %v303 = vpack.c.bf16 %v302, %v302
    %v304 = vld [vmem:[%s7] sm:$0xf]
    %v305 = vld [vmem:[%s7 + $0x4] sm:$0xf]
    %v306 = vld [vmem:[%s7 + $0x8] sm:$0xf]
    %v307 = vld [vmem:[%s7 + $0xc] sm:$0xf]
    %v308 = vld [vmem:[%s7 + $0x10] sm:$0xf]
    %v309 = vld [vmem:[%s7 + $0x14] sm:$0xf]
    %v310 = vld [vmem:[%s7 + $0x18] sm:$0xf]
    %v311 = vld [vmem:[%s7 + $0x1c] sm:$0xf]
    %v312 = vld [vmem:[%s7 + $0x20] sm:$0xf]
    %v313 = vld [vmem:[%s7 + $0x24] sm:$0xf]
    %v314 = vld [vmem:[%s7 + $0x28] sm:$0xf]
    %v315 = vld [vmem:[%s7 + $0x2c] sm:$0xf]
    %v316 = vld [vmem:[%s7 + $0x30] sm:$0xf]
    %v317 = vld [vmem:[%s7 + $0x34] sm:$0xf]
    %v318 = vld [vmem:[%s7 + $0x38] sm:$0xf]
    %v319 = vld [vmem:[%s7 + $0x3c] sm:$0xf]
    %v320 = vld [vmem:[%s8] sm:$0x1]
    %v322 = vlaneseq
    %v323 = vshrl.u32 %v322, 7
    %v324 = vsub.s32 0, %v323
    %v325 = vrot.slane %v320, %v324
    %v343 = vunpack.c.l.b16 %v304
    %v344 = vunpack.c.l.b16 %v305
    %v345 = vunpack.c.l.b16 %v306
    %v346 = vunpack.c.l.b16 %v307
    %v347 = vunpack.c.l.b16 %v308
    %v348 = vunpack.c.l.b16 %v309
    %v349 = vunpack.c.l.b16 %v310
    %v350 = vunpack.c.l.b16 %v311
    %v351 = vunpack.c.l.b16 %v312
    %v352 = vunpack.c.l.b16 %v313
    %v353 = vunpack.c.l.b16 %v314
    %v354 = vunpack.c.l.b16 %v315
    %v355 = vunpack.c.l.b16 %v316
    %v356 = vunpack.c.l.b16 %v317
    %v357 = vunpack.c.l.b16 %v318
    %v358 = vunpack.c.l.b16 %v319
    %v359 = vpack.c.b16 %v344, %v343
    %v360 = vpack.c.b16 %v346, %v345
    %v361 = vpack.c.b16 %v348, %v347
    %v362 = vpack.c.b16 %v350, %v349
    %v363 = vpack.c.b16 %v352, %v351
    %v364 = vpack.c.b16 %v354, %v353
    %v365 = vpack.c.b16 %v356, %v355
    %v366 = vpack.c.b16 %v358, %v357
    %375 = vmatprep.subr.bf16.mxu0 0
    %376 = vmatpush1.bf16.msra.mxu0 %v366
    %377 = vmatprep.subr.bf16.mxu0 0
    %378 = vmatpush1.bf16.msra.mxu0 %v365
    %379 = vmatprep.subr.bf16.mxu0 0
    %380 = vmatpush1.bf16.msra.mxu0 %v364
    %381 = vmatprep.subr.bf16.mxu0 0
    %382 = vmatpush1.bf16.msra.mxu0 %v363
    %383 = vmatprep.subr.bf16.mxu0 0
    %384 = vmatpush1.bf16.msra.mxu0 %v362
    %385 = vmatprep.subr.bf16.mxu0 0
    %386 = vmatpush1.bf16.msra.mxu0 %v361
    %387 = vmatprep.subr.bf16.mxu0 0
    %388 = vmatpush1.bf16.msra.mxu0 %v360
    %389 = vmatprep.subr.bf16.mxu0 0
    %390 = vmatpush1.bf16.msra.mxu0 %v359
    %391 = vmatprep.subr.bf16.mxu0 0
    %392 = vmatpush2.bf16.msra.mxu0 0
    %393 = vmatprep.subr.bf16.mxu0 0
    %394 = vmatpush2.bf16.msra.mxu0 0
    %395 = vmatprep.subr.bf16.mxu0 0
    %396 = vmatpush2.bf16.msra.mxu0 0
    %397 = vmatprep.subr.bf16.mxu0 0
    %398 = vmatpush2.bf16.msra.mxu0 0
    %399 = vmatprep.subr.bf16.mxu0 0
    %400 = vmatpush2.bf16.msra.mxu0 0
    %401 = vmatprep.subr.bf16.mxu0 0
    %402 = vmatpush2.bf16.msra.mxu0 0
    %403 = vmatprep.subr.bf16.mxu0 0
    %404 = vmatpush2.bf16.msra.mxu0 0
    %405 = vmatprep.subr.bf16.mxu0 0
    %406 = vmatpush2.bf16.msra.mxu0 0
    %407 = vmatprep.mubr.bf16.mxu0 0
    %408 = vmatmul.mubr.bf16.gmra.mxu0 %v303
    %v409 = vpop.f32.mrf.mxu0
    %v410 = vadd.f32 %v325, %v409
    %v411 = vpop.f32.mrf.mxu0
    %v412 = vpop.f32.mrf.mxu0
    %v413 = vpop.f32.mrf.mxu0
    %414 = vdwg.mxu0
    %vm415 = vcmask 64512
    %416 = vst.msk [vmem:[#allocation8] sm:$0xff] %vm415, %v410
    // Predicated region
    $region50: #{tpu_custom_call.1} parent=1 // pred_check
      _
    $region51: #{tpu_custom_call.1} parent=1 // pred_check_branch
      %418 = sbr.rel (0) target = $region53
    $region52: #{tpu_custom_call.1} parent=1 // pred_region
      %s420 = ssub.s32 128, 128
      %421 = vsyncadd [#allocation4], %s420
      %s423 = sshll.u32 [#allocation8], 4
      %s424 = int_to_ptr.vmem [resolvable:$true] %s423
      %426 = dma.vmem_to_hbm [thread:$0]  %s424, 128, %s9, [#allocation4]
    $region53: #{tpu_custom_call.1} parent=1 // pred_fallthru
      _
    // Predicated region
    $region54: #{tpu_custom_call.1} parent=1 // pred_check
      _
    $region55: #{tpu_custom_call.1} parent=1 // pred_check_branch
      %428 = sbr.rel (0) target = $region57
    $region56: #{tpu_custom_call.1} parent=1 // pred_region
      %429 = dma.done [#allocation4], 128
    $region57: #{tpu_custom_call.1} parent=1 // pred_fallthru
      _
    %430 = vsyncpa [#allocation3], 1
    %431 = vsyncpa [#allocation6], 1
    %432 = vsyncpa [#allocation4], 1

</llo_original>
